<compile_context>
chip_gen: v6e
topology: v6e:2x2x1
jax: 0.10.0
libtpu: 0.0.40
codegen_flags: <defaults>
</compile_context>

<pallas_src>
import jax
import jax.numpy as jnp
from jax.experimental import pallas as pl
from jax.experimental.pallas import tpu as pltpu


# ---------------------------------------------------------------------------
# Path 1 (default): zero-HBM-traffic identity via input/output aliasing.
# ---------------------------------------------------------------------------
def _alias_identity_kernel(x_hbm_ref, o_hbm_ref):
    # Output buffer aliases the input buffer (input_output_aliases={0: 0});
    # nothing has to be moved, so the body is intentionally empty.
    del x_hbm_ref, o_hbm_ref


def _identity_via_alias(x):
    return pl.pallas_call(
        _alias_identity_kernel,
        out_shape=jax.ShapeDtypeStruct(x.shape, x.dtype),
        in_specs=[pl.BlockSpec(memory_space=pl.ANY)],
        out_specs=pl.BlockSpec(memory_space=pl.ANY),
        input_output_aliases={0: 0},
    )(x)


# ---------------------------------------------------------------------------
# Path 2 (optional): tuned tiled copy, for callers that need a fresh buffer.
# ---------------------------------------------------------------------------
def _copy_kernel(x_ref, o_ref):
    # One vreg-aligned load + lane-dense store per block.
    o_ref[...] = x_ref[...]


def _vmem_capacity_bytes():
    """Physical VMEM per TensorCore; conservative fallback if unqueryable."""
    try:
        info = pltpu.get_tpu_info()
        cap = getattr(info, "vmem_capacity_bytes", None)
        if cap:
            return int(cap)
    except Exception:
        pass
    return 64 * 1024 * 1024  # v7x per-TC size (smallest current generation)


def _sublane_multiple(dtype):
    itemsize = jnp.dtype(dtype).itemsize
    # f32 -> 8 rows, bf16 -> 16, int8/fp8 -> 32 (native sublane packing).
    return max(8, 8 * (4 // max(1, itemsize)))


def _flatten_lane_dense(x):
    """Flatten to 2-D.  Identity => layout is free, so prefer a last dim that
    is a multiple of 128 (lane-dense, unmasked stores) whenever possible."""
    total = x.size
    if total % 1024 == 0:
        return x.reshape(total // 1024, 1024)
    if x.ndim >= 2:
        return x.reshape(-1, x.shape[-1])
    return x.reshape(1, total)


def _identity_via_copy(x):
    if x.size == 0:
        return x

    x2d = _flatten_lane_dense(x)
    M, D = x2d.shape

    cap = _vmem_capacity_bytes()
    # ~48 MiB limit on 64-MiB-per-TC parts (v7x), ~96 MiB on 128-MiB parts.
    vmem_limit = min(int(cap * 3 // 4), 100 * 1024 * 1024)
    tile_budget = vmem_limit // 2  # headroom: tile footprint <= half the limit

    row_bytes = D * x2d.dtype.itemsize
    sub = _sublane_multiple(x2d.dtype)
    # 2 arrays (in + out) x 2 pipeline buffers each = 4 tiles resident.
    max_rows = max(sub, (tile_budget // (4 * row_bytes)) // sub * sub)

    if M <= max_rows:
        tile_m = M                       # full-extent block: always legal
        grid = (1,)
    else:
        tile_m = max_rows                # multiple of the sublane packing
        grid = (pl.cdiv(M, tile_m),)     # ragged tail handled by Pallas

    out2d = pl.pallas_call(
        _copy_kernel,
        out_shape=jax.ShapeDtypeStruct((M, D), x2d.dtype),
        grid_spec=pltpu.PrefetchScalarGridSpec(
            num_scalar_prefetch=0,
            grid=grid,
            in_specs=[pl.BlockSpec((tile_m, D), lambda i: (i, 0))],
            out_specs=pl.BlockSpec((tile_m, D), lambda i: (i, 0)),
        ),
        compiler_params=pltpu.CompilerParams(
            dimension_semantics=("parallel",),  # megacore sharding on v7x
            vmem_limit_bytes=vmem_limit,
        ),
    )(x2d)

    return out2d.reshape(x.shape)


# ---------------------------------------------------------------------------
# Module forward.
# ---------------------------------------------------------------------------
def adapter_forward(x, *, materialize_copy=False):
    """Forward of LLMadapter_test (identity).

    Default: zero-traffic pass-through (output aliases the input; no-op body).
    Set materialize_copy=True to force a freshly materialized copy through the
    tuned tiled copy kernel.
    """
    if materialize_copy:
        return _identity_via_copy(x)
    return _identity_via_alias(x)


if __name__ == "__main__":
    # Small LLM-adapter style input [btz, seq, hidden].
    btz, seq_len, hidden = 2, 8, 32
    key = jax.random.PRNGKey(0)
    x = jax.random.normal(key, (btz, seq_len, hidden), dtype=jnp.float32)

    # Default zero-copy aliased path.
    out = jax.block_until_ready(adapter_forward(x))
    assert out.shape == x.shape and out.dtype == x.dtype
    assert jnp.array_equal(out, x), "identity mismatch (alias path)"

    # Materialized-copy path (small-D fallback layout).
    out_copy = jax.block_until_ready(adapter_forward(x, materialize_copy=True))
    assert jnp.array_equal(out_copy, x), "identity mismatch (copy path)"

    # Materialized-copy path exercising the lane-dense flatten branch
    # (element count divisible by 1024 -> reshaped to (_, 1024)).
    x2 = jax.random.normal(jax.random.PRNGKey(1), (2, 8, 64), dtype=jnp.float32)
    out2 = jax.block_until_ready(adapter_forward(x2, materialize_copy=True))
    assert jnp.array_equal(out2, x2), "identity mismatch (lane-dense copy path)"

    print("KERNEL_OK")
</pallas_src>

<mosaic_0001>
module attributes {stable_mosaic.version = 11 : i64} {
  func.func @_alias_identity_kernel(%arg0: memref<2x8x32xf32, #tpu.memory_space<any>>, %arg1: memref<2x8x32xf32, #tpu.memory_space<any>>) attributes {dimension_semantics = [], scalar_prefetch = 0 : i64, scratch_operands = 0 : i64, tpu.core_type = #tpu.core_type<tc>} {
    return
  }
}

</mosaic_0001>

<llo_original>
// kernel: tpu_custom_call.1
$region0: #{tpu_custom_call.1}
  #allocation0 [shape = 'u32[]', space=smem, size = 0x4, offset = 0x4, fixed_abs, tag = 'smem constant byte address 0x4 - core index']
  #allocation1 [shape = 'u32[144,128]{1,0:T(1,128)}', space=vmem, size = 0x12000, scoped, tag = 'internal scratch']
  %s0 = inlined_call_operand.hbm [shape: f32[2,8,32], index: 0, kind: input, shape index: {}, may-alias: {0,1}]
  %s1 = inlined_call_operand.hbm [shape: f32[2,8,32], index: 1, kind: output, shape index: {}, may-alias: {0,1}]
  %s2 = sld [smem:[#allocation0]]
  $region2: #{tpu_custom_call.1} parent=0
    _
  %s4 = ssub.s32 1, %s2
  %s5 = scalar_select 0, %s4, %s2

</llo_original>
